<compile_context>
chip_gen: v6e
topology: v6e:2x2x1
jax: 0.10.0
libtpu: 0.0.40
codegen_flags: <defaults>
</compile_context>

<pallas_src>
import numpy as np
import jax
import jax.numpy as jnp
from jax import lax
from jax.experimental import pallas as pl
from jax.experimental.pallas import tpu as pltpu


def _basic_block_kernel(x_ref, w1_ref, s1_ref, b1_ref, w2_ref, s2_ref, b2_ref,
                        out_ref):
    # x_ref  : (B_blk, H, W*C) f32   lane-folded input block (also the residual)
    # w1_ref : (3*W*C, W*C)    bf16  conv1 band-packed weights
    # s1_ref : (1, W*C)        f32   folded BN1 scale, tiled across W
    # b1_ref : (1, W*C)        f32   folded BN1 bias,  tiled across W
    # w2_ref : (3*W*C, W*C)    bf16  conv2 band-packed weights
    # s2_ref : (1, W*C)        f32   folded BN2 scale, tiled across W
    # b2_ref : (1, W*C)        f32   folded BN2 bias,  tiled across W
    # out_ref: (B_blk, H, W*C) f32
    B, H, L = x_ref.shape
    x = x_ref[...]                                   # (B, H, L) f32

    def row_shift(v, dh):
        # result[:, i, :] = v[:, i + dh, :]; out-of-range rows are zero
        # (vertical conv zero padding).  Per-image: the shift never crosses
        # the batch axis because it acts on axis=1 of the (B, H, L) value.
        z = jnp.zeros((B, 1, L), v.dtype)
        if dh == -1:
            return jnp.concatenate([z, v[:, : H - 1, :]], axis=1)
        else:  # dh == +1
            return jnp.concatenate([v[:, 1:, :], z], axis=1)

    def band_operand(v):
        # (B, H, L) f32 -> (B*H, 3L) bf16 : [v(i-1) | v(i) | v(i+1)] per row,
        # built entirely in registers (lane-axis concat at 128-lane offsets).
        cat = jnp.concatenate([row_shift(v, -1), v, row_shift(v, +1)], axis=2)
        return cat.astype(jnp.bfloat16).reshape(B * H, 3 * L)

    # ---- conv1 as a single band matmul (bf16 operands, f32 accumulate) ----
    a1 = jnp.dot(band_operand(x), w1_ref[...],
                 preferred_element_type=jnp.float32)          # (B*H, L) f32
    # ---- bn1 + relu (f32), stays in registers ----
    y1 = jnp.maximum(a1 * s1_ref[...] + b1_ref[...], 0.0)

    # ---- conv2 as a single band matmul ----
    a2 = jnp.dot(band_operand(y1.reshape(B, H, L)), w2_ref[...],
                 preferred_element_type=jnp.float32)          # (B*H, L) f32

    # ---- bn2 + residual (f32, from the same x block) + relu ----
    y2 = jnp.maximum(a2 * s2_ref[...] + b2_ref[...] + x.reshape(B * H, L), 0.0)
    out_ref[...] = y2.reshape(B, H, L).astype(out_ref.dtype)


def _pack_band_weight(w_hwio, W):
    """(3,3,Cin,Cout) HWIO -> (3*W*Cin, W*Cout) bf16 band matrix.

    M[kh*W*Cin + jin*Cin + ci, jout*Cout + co] = w[kh, jin-jout+1, ci, co]
    when 0 <= jin-jout+1 <= 2, else 0 (absent entries give horizontal zero pad).
    """
    KH, KW, Cin, Cout = w_hwio.shape
    sel = np.zeros((KW, W, W), np.float32)
    for kw in range(KW):
        for jout in range(W):
            jin = jout + kw - 1
            if 0 <= jin < W:
                sel[kw, jin, jout] = 1.0
    m = jnp.einsum('kjJ,hkio->hjiJo', jnp.asarray(sel),
                   w_hwio.astype(jnp.float32))        # (KH, W, Cin, W, Cout)
    return m.reshape(KH * W * Cin, W * Cout).astype(jnp.bfloat16)


def _pick_batch_block(N):
    # Largest divisor of N (<= 4) that still leaves >= 2 grid steps when N >= 2,
    # so both v7x TensorCores get work while amortising per-step overhead.
    for cand in (4, 2, 1):
        if N % cand == 0 and N // cand >= 2:
            return cand
    return 1


def basic_block_pallas(x_nhwc, w1_hwio, s1, b1, w2_hwio, s2, b2, b_blk=None):
    """x_nhwc: (N,H,W,C) f32.  wN_hwio: (3,3,Cin,Cout) f32.  Returns (N,H,W,C) f32."""
    N, H, W, Cin = x_nhwc.shape
    Cout = w1_hwio.shape[-1]
    assert Cin == Cout, "identity path requires Cin == Cout (no downsample)"
    C = Cout
    L = W * C

    if b_blk is None:
        b_blk = _pick_batch_block(N)
    assert N % b_blk == 0

    # Lane-folded view: free reshape of the contiguous NHWC array.
    x_fold = x_nhwc.reshape(N, H, L).astype(jnp.float32)

    w1m = _pack_band_weight(w1_hwio, W)                      # (3L, L) bf16
    w2m = _pack_band_weight(w2_hwio, W)
    s1t = jnp.tile(s1.astype(jnp.float32), W).reshape(1, L)  # lane index = w*C + c
    b1t = jnp.tile(b1.astype(jnp.float32), W).reshape(1, L)
    s2t = jnp.tile(s2.astype(jnp.float32), W).reshape(1, L)
    b2t = jnp.tile(b2.astype(jnp.float32), W).reshape(1, L)

    grid_spec = pltpu.PrefetchScalarGridSpec(
        num_scalar_prefetch=0,
        grid=(N // b_blk,),
        in_specs=[
            pl.BlockSpec((b_blk, H, L), lambda n: (n, 0, 0)),   # x (lane-dense)
            pl.BlockSpec((3 * L, L), lambda n: (0, 0)),         # conv1 band weight
            pl.BlockSpec((1, L), lambda n: (0, 0)),             # bn1 scale
            pl.BlockSpec((1, L), lambda n: (0, 0)),             # bn1 bias
            pl.BlockSpec((3 * L, L), lambda n: (0, 0)),         # conv2 band weight
            pl.BlockSpec((1, L), lambda n: (0, 0)),             # bn2 scale
            pl.BlockSpec((1, L), lambda n: (0, 0)),             # bn2 bias
        ],
        out_specs=pl.BlockSpec((b_blk, H, L), lambda n: (n, 0, 0)),
        scratch_shapes=[],                                      # no VMEM scratch
    )

    out_fold = pl.pallas_call(
        _basic_block_kernel,
        out_shape=jax.ShapeDtypeStruct((N, H, L), jnp.float32),
        grid_spec=grid_spec,
        compiler_params=pltpu.CompilerParams(
            dimension_semantics=("parallel",)),
    )(x_fold, w1m, s1t, b1t, w2m, s2t, b2t)

    return out_fold.reshape(N, H, W, C)


def _reference(x_nhwc, w1, s1, b1, w2, s2, b2):
    """Pure-JAX reference mirroring the kernel's bf16-operand / f32-accumulate convs."""
    dn = lax.conv_dimension_numbers(x_nhwc.shape, w1.shape, ("NHWC", "HWIO", "NHWC"))
    o = lax.conv_general_dilated(
        x_nhwc.astype(jnp.bfloat16), w1.astype(jnp.bfloat16),
        (1, 1), ((1, 1), (1, 1)), dimension_numbers=dn,
        preferred_element_type=jnp.float32)
    o = jnp.maximum(o * s1 + b1, 0.0)
    o = lax.conv_general_dilated(
        o.astype(jnp.bfloat16), w2.astype(jnp.bfloat16),
        (1, 1), ((1, 1), (1, 1)), dimension_numbers=dn,
        preferred_element_type=jnp.float32)
    o = o * s2 + b2 + x_nhwc
    return jnp.maximum(o, 0.0)


if __name__ == "__main__":
    key = jax.random.PRNGKey(0)
    N, C, Hh, Ww = 2, 8, 16, 16          # inplanes == planes == 8, stride=1, no downsample

    k = jax.random.split(key, 9)
    # PyTorch NCHW input -> NHWC for the kernel.
    x_nchw = jax.random.normal(k[0], (N, C, Hh, Ww), dtype=jnp.float32)
    x_nhwc = jnp.transpose(x_nchw, (0, 2, 3, 1))

    # conv weights: torch shape (Cout, Cin, 3, 3) -> HWIO (3, 3, Cin, Cout)
    w1_t = jax.random.normal(k[1], (C, C, 3, 3), dtype=jnp.float32) * 0.1
    w2_t = jax.random.normal(k[2], (C, C, 3, 3), dtype=jnp.float32) * 0.1
    w1 = jnp.transpose(w1_t, (2, 3, 1, 0))
    w2 = jnp.transpose(w2_t, (2, 3, 1, 0))

    # BatchNorm params (inference form), deterministic.
    eps = 1e-5
    g1 = 1.0 + 0.1 * jax.random.normal(k[3], (C,), dtype=jnp.float32)
    be1 = 0.1 * jax.random.normal(k[4], (C,), dtype=jnp.float32)
    m1 = 0.1 * jax.random.normal(k[5], (C,), dtype=jnp.float32)
    v1 = jnp.abs(jax.random.normal(k[6], (C,), dtype=jnp.float32)) + 0.5
    g2 = 1.0 + 0.1 * jax.random.normal(k[7], (C,), dtype=jnp.float32)
    be2 = 0.1 * jax.random.normal(k[8], (C,), dtype=jnp.float32)
    m2 = jnp.zeros((C,), jnp.float32)
    v2 = jnp.ones((C,), jnp.float32)

    s1 = g1 / jnp.sqrt(v1 + eps)
    b1 = be1 - m1 * s1
    s2 = g2 / jnp.sqrt(v2 + eps)
    b2 = be2 - m2 * s2

    out = basic_block_pallas(x_nhwc, w1, s1, b1, w2, s2, b2)
    out = jax.block_until_ready(out)

    ref = _reference(x_nhwc, w1, s1, b1, w2, s2, b2)
    max_err = jnp.max(jnp.abs(out - ref))
    # bf16 MXU operands -> compare at bf16-level tolerance.
    assert jnp.allclose(out, ref, atol=1e-2, rtol=1e-2), f"mismatch vs reference (max {max_err})"

    print("KERNEL_OK")
</pallas_src>

<mosaic_0001>
module attributes {stable_mosaic.version = 11 : i64} {
  func.func @_basic_block_kernel(%arg0: i32, %arg1: memref<1x16x128xf32, #tpu.memory_space<vmem>>, %arg2: memref<384x128xbf16, #tpu.memory_space<vmem>>, %arg3: memref<1x128xf32, #tpu.memory_space<vmem>>, %arg4: memref<1x128xf32, #tpu.memory_space<vmem>>, %arg5: memref<384x128xbf16, #tpu.memory_space<vmem>>, %arg6: memref<1x128xf32, #tpu.memory_space<vmem>>, %arg7: memref<1x128xf32, #tpu.memory_space<vmem>>, %arg8: memref<1x16x128xf32, #tpu.memory_space<vmem>>) attributes {dimension_semantics = [#tpu.dimension_semantics<parallel>], iteration_bounds = array<i64: 2>, scalar_prefetch = 0 : i64, scratch_operands = 0 : i64, tpu.core_type = #tpu.core_type<tc>, window_params = [{transform_indices = @transform_0, window_bounds = array<i64: 1, 16, 128>}, {pipeline_mode = #tpu.pipeline_mode<synchronous>, transform_indices = @transform_1, window_bounds = array<i64: 384, 128>}, {pipeline_mode = #tpu.pipeline_mode<synchronous>, transform_indices = @transform_2, window_bounds = array<i64: 1, 128>}, {pipeline_mode = #tpu.pipeline_mode<synchronous>, transform_indices = @transform_3, window_bounds = array<i64: 1, 128>}, {pipeline_mode = #tpu.pipeline_mode<synchronous>, transform_indices = @transform_4, window_bounds = array<i64: 384, 128>}, {pipeline_mode = #tpu.pipeline_mode<synchronous>, transform_indices = @transform_5, window_bounds = array<i64: 1, 128>}, {pipeline_mode = #tpu.pipeline_mode<synchronous>, transform_indices = @transform_6, window_bounds = array<i64: 1, 128>}, {transform_indices = @transform_7, window_bounds = array<i64: 1, 16, 128>}]} {
    %c0 = arith.constant 0 : index
    %c0_0 = arith.constant 0 : index
    %c0_1 = arith.constant 0 : index
    %0 = vector.load %arg1[%c0, %c0_0, %c0_1] : memref<1x16x128xf32, #tpu.memory_space<vmem>>, vector<1x16x128xf32>
    %cst = arith.constant 0.000000e+00 : f32
    %1 = vector.broadcast %cst : f32 to vector<1x1x128xf32>
    %2 = vector.extract_strided_slice %0 {offsets = [0, 0, 0], sizes = [1, 15, 128], strides = [1, 1, 1]} : vector<1x16x128xf32> to vector<1x15x128xf32>
    %3 = tpu.concatenate %1, %2 in 1 : vector<1x1x128xf32>, vector<1x15x128xf32> -> vector<1x16x128xf32>
    %cst_2 = arith.constant 0.000000e+00 : f32
    %4 = vector.broadcast %cst_2 : f32 to vector<1x1x128xf32>
    %5 = vector.extract_strided_slice %0 {offsets = [0, 1, 0], sizes = [1, 15, 128], strides = [1, 1, 1]} : vector<1x16x128xf32> to vector<1x15x128xf32>
    %6 = tpu.concatenate %5, %4 in 1 : vector<1x15x128xf32>, vector<1x1x128xf32> -> vector<1x16x128xf32>
    %7 = tpu.concatenate %3, %0, %6 in 2 : vector<1x16x128xf32>, vector<1x16x128xf32>, vector<1x16x128xf32> -> vector<1x16x384xf32>
    %8 = arith.truncf %7 : vector<1x16x384xf32> to vector<1x16x384xbf16>
    %9 = vector.shape_cast %8 : vector<1x16x384xbf16> to vector<16x384xbf16>
    %c0_3 = arith.constant 0 : index
    %c0_4 = arith.constant 0 : index
    %10 = vector.load %arg2[%c0_3, %c0_4] : memref<384x128xbf16, #tpu.memory_space<vmem>>, vector<384x128xbf16>
    %cst_5 = arith.constant dense<0.000000e+00> : vector<16x128xf32>
    %11 = tpu.matmul %9, %10, %cst_5 {dimension_numbers = #tpu.dot_dimension_numbers<[1], [0], [0], [1], [0, 0, 1, 1], [], []>} : vector<16x384xbf16>, vector<384x128xbf16>, vector<16x128xf32> -> vector<16x128xf32>
    %c0_6 = arith.constant 0 : index
    %c0_7 = arith.constant 0 : index
    %12 = vector.load %arg3[%c0_6, %c0_7] : memref<1x128xf32, #tpu.memory_space<vmem>>, vector<1x128xf32>
    %13 = vector.broadcast %12 : vector<1x128xf32> to vector<16x128xf32>
    %14 = arith.mulf %11, %13 : vector<16x128xf32>
    %c0_8 = arith.constant 0 : index
    %c0_9 = arith.constant 0 : index
    %15 = vector.load %arg4[%c0_8, %c0_9] : memref<1x128xf32, #tpu.memory_space<vmem>>, vector<1x128xf32>
    %16 = vector.broadcast %15 : vector<1x128xf32> to vector<16x128xf32>
    %17 = arith.addf %14, %16 : vector<16x128xf32>
    %cst_10 = arith.constant 0.000000e+00 : f32
    %18 = vector.broadcast %cst_10 : f32 to vector<16x128xf32>
    %19 = arith.maximumf %17, %18 : vector<16x128xf32>
    %20 = vector.shape_cast %19 : vector<16x128xf32> to vector<1x16x128xf32>
    %cst_11 = arith.constant 0.000000e+00 : f32
    %21 = vector.broadcast %cst_11 : f32 to vector<1x1x128xf32>
    %22 = vector.extract_strided_slice %20 {offsets = [0, 0, 0], sizes = [1, 15, 128], strides = [1, 1, 1]} : vector<1x16x128xf32> to vector<1x15x128xf32>
    %23 = tpu.concatenate %21, %22 in 1 : vector<1x1x128xf32>, vector<1x15x128xf32> -> vector<1x16x128xf32>
    %cst_12 = arith.constant 0.000000e+00 : f32
    %24 = vector.broadcast %cst_12 : f32 to vector<1x1x128xf32>
    %25 = vector.extract_strided_slice %20 {offsets = [0, 1, 0], sizes = [1, 15, 128], strides = [1, 1, 1]} : vector<1x16x128xf32> to vector<1x15x128xf32>
    %26 = tpu.concatenate %25, %24 in 1 : vector<1x15x128xf32>, vector<1x1x128xf32> -> vector<1x16x128xf32>
    %27 = tpu.concatenate %23, %20, %26 in 2 : vector<1x16x128xf32>, vector<1x16x128xf32>, vector<1x16x128xf32> -> vector<1x16x384xf32>
    %28 = arith.truncf %27 : vector<1x16x384xf32> to vector<1x16x384xbf16>
    %29 = vector.shape_cast %28 : vector<1x16x384xbf16> to vector<16x384xbf16>
    %c0_13 = arith.constant 0 : index
    %c0_14 = arith.constant 0 : index
    %30 = vector.load %arg5[%c0_13, %c0_14] : memref<384x128xbf16, #tpu.memory_space<vmem>>, vector<384x128xbf16>
    %cst_15 = arith.constant dense<0.000000e+00> : vector<16x128xf32>
    %31 = tpu.matmul %29, %30, %cst_15 {dimension_numbers = #tpu.dot_dimension_numbers<[1], [0], [0], [1], [0, 0, 1, 1], [], []>} : vector<16x384xbf16>, vector<384x128xbf16>, vector<16x128xf32> -> vector<16x128xf32>
    %c0_16 = arith.constant 0 : index
    %c0_17 = arith.constant 0 : index
    %32 = vector.load %arg6[%c0_16, %c0_17] : memref<1x128xf32, #tpu.memory_space<vmem>>, vector<1x128xf32>
    %33 = vector.broadcast %32 : vector<1x128xf32> to vector<16x128xf32>
    %34 = arith.mulf %31, %33 : vector<16x128xf32>
    %c0_18 = arith.constant 0 : index
    %c0_19 = arith.constant 0 : index
    %35 = vector.load %arg7[%c0_18, %c0_19] : memref<1x128xf32, #tpu.memory_space<vmem>>, vector<1x128xf32>
    %36 = vector.broadcast %35 : vector<1x128xf32> to vector<16x128xf32>
    %37 = arith.addf %34, %36 : vector<16x128xf32>
    %38 = vector.shape_cast %0 : vector<1x16x128xf32> to vector<16x128xf32>
    %39 = arith.addf %37, %38 : vector<16x128xf32>
    %cst_20 = arith.constant 0.000000e+00 : f32
    %40 = vector.broadcast %cst_20 : f32 to vector<16x128xf32>
    %41 = arith.maximumf %39, %40 : vector<16x128xf32>
    %42 = vector.shape_cast %41 : vector<16x128xf32> to vector<1x16x128xf32>
    %c0_21 = arith.constant 0 : index
    %c0_22 = arith.constant 0 : index
    %c0_23 = arith.constant 0 : index
    %43 = vector.load %arg8[%c0_21, %c0_22, %c0_23] : memref<1x16x128xf32, #tpu.memory_space<vmem>>, vector<1x16x128xf32>
    tpu.vector_store %arg8[%c0_21, %c0_22, %c0_23], %42 {strides = array<i32>} : memref<1x16x128xf32, #tpu.memory_space<vmem>>, vector<1x16x128xf32>,
    return
  }
  func.func @transform_0(%arg0: i32) -> (i32, i32, i32) {
    %c0_i32 = arith.constant 0 : i32
    %c0_i32_0 = arith.constant 0 : i32
    %c0_i32_1 = arith.constant 0 : i32
    return %arg0, %c0_i32, %c0_i32_0 : i32, i32, i32
  }
  func.func @transform_1(%arg0: i32) -> (i32, i32) {
    %c0_i32 = arith.constant 0 : i32
    %c0_i32_0 = arith.constant 0 : i32
    %c0_i32_1 = arith.constant 0 : i32
    return %c0_i32, %c0_i32_0 : i32, i32
  }
  func.func @transform_2(%arg0: i32) -> (i32, i32) {
    %c0_i32 = arith.constant 0 : i32
    %c0_i32_0 = arith.constant 0 : i32
    %c0_i32_1 = arith.constant 0 : i32
    return %c0_i32, %c0_i32_0 : i32, i32
  }
  func.func @transform_3(%arg0: i32) -> (i32, i32) {
    %c0_i32 = arith.constant 0 : i32
    %c0_i32_0 = arith.constant 0 : i32
    %c0_i32_1 = arith.constant 0 : i32
    return %c0_i32, %c0_i32_0 : i32, i32
  }
  func.func @transform_4(%arg0: i32) -> (i32, i32) {
    %c0_i32 = arith.constant 0 : i32
    %c0_i32_0 = arith.constant 0 : i32
    %c0_i32_1 = arith.constant 0 : i32
    return %c0_i32, %c0_i32_0 : i32, i32
  }
  func.func @transform_5(%arg0: i32) -> (i32, i32) {
    %c0_i32 = arith.constant 0 : i32
    %c0_i32_0 = arith.constant 0 : i32
    %c0_i32_1 = arith.constant 0 : i32
    return %c0_i32, %c0_i32_0 : i32, i32
  }
  func.func @transform_6(%arg0: i32) -> (i32, i32) {
    %c0_i32 = arith.constant 0 : i32
    %c0_i32_0 = arith.constant 0 : i32
    %c0_i32_1 = arith.constant 0 : i32
    return %c0_i32, %c0_i32_0 : i32, i32
  }
  func.func @transform_7(%arg0: i32) -> (i32, i32, i32) {
    %c0_i32 = arith.constant 0 : i32
    %c0_i32_0 = arith.constant 0 : i32
    %c0_i32_1 = arith.constant 0 : i32
    return %arg0, %c0_i32, %c0_i32_0 : i32, i32, i32
  }
}

</mosaic_0001>

<llo_original>
// kernel: tpu_custom_call.1
$region0: #{tpu_custom_call.1}
  #allocation0 [shape = 'u32[]', space=smem, size = 0x4, offset = 0x4, fixed_abs, tag = 'smem constant byte address 0x4 - core index']
  #allocation1 [shape = 'u32[144,128]{1,0:T(1,128)}', space=vmem, size = 0x12000, scoped, tag = 'internal scratch']
  %s0 = inlined_call_operand.hbm [shape: f32[2,16,128], index: 0, kind: input, shape index: {}]
  %s1 = inlined_call_operand.hbm [shape: bf16[384,128], index: 1, kind: input, shape index: {}]
  %s2 = inlined_call_operand.vmem [shape: f32[1,128], index: 2, kind: input, shape index: {}]
  %s3 = inlined_call_operand.vmem [shape: f32[1,128], index: 3, kind: input, shape index: {}]
  %s4 = inlined_call_operand.hbm [shape: bf16[384,128], index: 4, kind: input, shape index: {}]
  %s5 = inlined_call_operand.vmem [shape: f32[1,128], index: 5, kind: input, shape index: {}]
  %s6 = inlined_call_operand.vmem [shape: f32[1,128], index: 6, kind: input, shape index: {}]
  %s7 = inlined_call_operand.hbm [shape: f32[2,16,128], index: 7, kind: output, shape index: {}]
  %s8 = sld [smem:[#allocation0]]
  $region73: #{tpu_custom_call.1} parent=0
    _
  %s10 = ssub.s32 1, %s8
  %s11 = scalar_select 0, %s10, %s8
  $region1: #{tpu_custom_call.1} parent=0
    #allocation2 [shape = 'u8[16384]{0}', space=vmem, size = 0x4000, scoped, tag = 'input window, operand 0']
    #allocation3 [shape = 's32[2]{0}', space=sflag, size = 0x8, scoped, tag = 'scoped memory for tpu_custom_call.1']
    #allocation4 [shape = 's32[2]{0}', space=sflag, size = 0x8, scoped, tag = 'scoped memory for tpu_custom_call.1']
    #allocation5 [shape = 'u8[98304]{0}', space=vmem, size = 0x18000, scoped, tag = 'input window, operand 1, single buffered']
    #allocation6 [shape = 's32[1]{0}', space=sflag, size = 0x4, scoped, tag = 'scoped memory for tpu_custom_call.1']
    #allocation7 [shape = 'u8[98304]{0}', space=vmem, size = 0x18000, scoped, tag = 'input window, operand 4, single buffered']
    #allocation8 [shape = 'u8[16384]{0}', space=vmem, size = 0x4000, scoped, tag = 'output window, operand 0']
    %12 = vsyncpa [#allocation3], 0
    %s13 = scalar_lea.sflag [#allocation3], 1
    %14 = vsyncpa %s13, 0
    %15 = vsyncpa [#allocation6], 0
    %16 = vsyncpa [#allocation4], 0
    %s17 = scalar_lea.sflag [#allocation4], 1
    %18 = vsyncpa %s17, 0
    loop: start=0, step=1, limit=4
    $region2: #{tpu_custom_call.1} parent=1 // loop_pre_header
      _
    $region3: #{tpu_custom_call.1} parent=1 // loop_header
      %s20 = sphi 0, %s24
      %p21 = scmp.ge.s32.totalorder %s20, 4
      %s30 = sphi 0, %s32
      %s33 = sphi 0, %s30
      %s34 = sphi 0, %s33
      %s50 = sphi 0, %s34
      %s54 = sphi 0, %s54
      %s56 = sphi 0, %s54
      %s57 = sphi 0, %s56
      %s71 = sphi 0, %s57
      %s75 = sphi 0, %s75
      %s77 = sphi 0, %s75
      %s78 = sphi 0, %s77
      %s92 = sphi 0, %s78
      %s96 = sphi 0, %s96
      %s98 = sphi 0, %s96
      %s99 = sphi 0, %s98
      %s113 = sphi 0, %s99
      %s117 = sphi 0, %s117
      %s119 = sphi 0, %s117
      %s120 = sphi 0, %s119
      %s134 = sphi 0, %s120
      %s138 = sphi 0, %s138
      %s140 = sphi 0, %s138
      %s141 = sphi 0, %s140
      %s155 = sphi 0, %s141
      %s159 = sphi 0, %s159
      %s161 = sphi 0, %s159
      %s162 = sphi 0, %s161
      %s176 = sphi 0, %s162
      %s182 = sphi 0, %s184
      %s185 = sphi 0, %s182
      %s186 = sphi 0, %s185
      %s202 = sphi 0, %s186
    $region4: #{tpu_custom_call.1} parent=1 // loop_header_branch
      %23 = sbr.rel (%p21) target = $region8
    $region5: #{tpu_custom_call.1} parent=1 // loop_body
      %s25 = ssub.s32 %s20, 1
      %s26 = ssub.s32 %s20, 2
      %s27 = sadd.s32 %s20, 1
      %s28 = ssub.s32 %s20, %s27
      %p29 = scmp.eq.s32.totalorder %s28, 0
      %s31 = sadd.s32 %s30, 1
      %s32 = scalar_select %p29, %s30, %s31
      %p35 = pneg %p29
      %p36 = scmp.eq.s32.totalorder %s20, 1
      %p37 = por %p35, %p36
      %p38 = scmp.ne.s32.totalorder %s30, %s33
      %p39 = scmp.eq.s32.totalorder %s20, 0
      %p40 = por %p38, %p39
      %p41 = scmp.ne.s32.totalorder %s30, %s33
      %p42 = scmp.eq.s32.totalorder %s25, 1
      %p43 = por %p41, %p42
      %p44 = scmp.ne.s32.totalorder %s33, %s34
      %p45 = scmp.eq.s32.totalorder %s25, 0
      %p46 = por %p44, %p45
      %p47 = scmp.ne.s32.totalorder %s33, %s34
      %p48 = scmp.eq.s32.totalorder %s26, 1
      %p49 = por %p47, %p48
      %p51 = scmp.ne.s32.totalorder %s34, %s50
      %p52 = scmp.eq.s32.totalorder %s26, 0
      %p53 = por %p51, %p52
      %s55 = sadd.s32 %s54, 1
      %p58 = scmp.eq.s32.totalorder %s20, 1
      %p59 = scmp.ne.s32.totalorder %s54, %s56
      %p60 = scmp.eq.s32.totalorder %s20, 0
      %p61 = por %p59, %p60
      %p62 = scmp.ne.s32.totalorder %s54, %s56
      %p63 = scmp.eq.s32.totalorder %s25, 1
      %p64 = por %p62, %p63
      %p65 = scmp.ne.s32.totalorder %s56, %s57
      %p66 = scmp.eq.s32.totalorder %s25, 0
      %p67 = por %p65, %p66
      %p68 = scmp.ne.s32.totalorder %s56, %s57
      %p69 = scmp.eq.s32.totalorder %s26, 1
      %p70 = por %p68, %p69
      %p72 = scmp.ne.s32.totalorder %s57, %s71
      %p73 = scmp.eq.s32.totalorder %s26, 0
      %p74 = por %p72, %p73
      %s76 = sadd.s32 %s75, 1
      %p79 = scmp.eq.s32.totalorder %s20, 1
      %p80 = scmp.ne.s32.totalorder %s75, %s77
      %p81 = scmp.eq.s32.totalorder %s20, 0
      %p82 = por %p80, %p81
      %p83 = scmp.ne.s32.totalorder %s75, %s77
      %p84 = scmp.eq.s32.totalorder %s25, 1
      %p85 = por %p83, %p84
      %p86 = scmp.ne.s32.totalorder %s77, %s78
      %p87 = scmp.eq.s32.totalorder %s25, 0
      %p88 = por %p86, %p87
      %p89 = scmp.ne.s32.totalorder %s77, %s78
      %p90 = scmp.eq.s32.totalorder %s26, 1
      %p91 = por %p89, %p90
      %p93 = scmp.ne.s32.totalorder %s78, %s92
      %p94 = scmp.eq.s32.totalorder %s26, 0
      %p95 = por %p93, %p94
      %s97 = sadd.s32 %s96, 1
      %p100 = scmp.eq.s32.totalorder %s20, 1
      %p101 = scmp.ne.s32.totalorder %s96, %s98
      %p102 = scmp.eq.s32.totalorder %s20, 0
      %p103 = por %p101, %p102
      %p104 = scmp.ne.s32.totalorder %s96, %s98
      %p105 = scmp.eq.s32.totalorder %s25, 1
      %p106 = por %p104, %p105
      %p107 = scmp.ne.s32.totalorder %s98, %s99
      %p108 = scmp.eq.s32.totalorder %s25, 0
      %p109 = por %p107, %p108
      %p110 = scmp.ne.s32.totalorder %s98, %s99
      %p111 = scmp.eq.s32.totalorder %s26, 1
      %p112 = por %p110, %p111
      %p114 = scmp.ne.s32.totalorder %s99, %s113
      %p115 = scmp.eq.s32.totalorder %s26, 0
      %p116 = por %p114, %p115
      %s118 = sadd.s32 %s117, 1
      %p121 = scmp.eq.s32.totalorder %s20, 1
      %p122 = scmp.ne.s32.totalorder %s117, %s119
      %p123 = scmp.eq.s32.totalorder %s20, 0
      %p124 = por %p122, %p123
      %p125 = scmp.ne.s32.totalorder %s117, %s119
      %p126 = scmp.eq.s32.totalorder %s25, 1
      %p127 = por %p125, %p126
      %p128 = scmp.ne.s32.totalorder %s119, %s120
      %p129 = scmp.eq.s32.totalorder %s25, 0
      %p130 = por %p128, %p129
      %p131 = scmp.ne.s32.totalorder %s119, %s120
      %p132 = scmp.eq.s32.totalorder %s26, 1
      %p133 = por %p131, %p132
      %p135 = scmp.ne.s32.totalorder %s120, %s134
      %p136 = scmp.eq.s32.totalorder %s26, 0
      %p137 = por %p135, %p136
      %s139 = sadd.s32 %s138, 1
      %p142 = scmp.eq.s32.totalorder %s20, 1
      %p143 = scmp.ne.s32.totalorder %s138, %s140
      %p144 = scmp.eq.s32.totalorder %s20, 0
      %p145 = por %p143, %p144
      %p146 = scmp.ne.s32.totalorder %s138, %s140
      %p147 = scmp.eq.s32.totalorder %s25, 1
      %p148 = por %p146, %p147
      %p149 = scmp.ne.s32.totalorder %s140, %s141
      %p150 = scmp.eq.s32.totalorder %s25, 0
      %p151 = por %p149, %p150
      %p152 = scmp.ne.s32.totalorder %s140, %s141
      %p153 = scmp.eq.s32.totalorder %s26, 1
      %p154 = por %p152, %p153
      %p156 = scmp.ne.s32.totalorder %s141, %s155
      %p157 = scmp.eq.s32.totalorder %s26, 0
      %p158 = por %p156, %p157
      %s160 = sadd.s32 %s159, 1
      %p163 = scmp.eq.s32.totalorder %s20, 1
      %p164 = scmp.ne.s32.totalorder %s159, %s161
      %p165 = scmp.eq.s32.totalorder %s20, 0
      %p166 = por %p164, %p165
      %p167 = scmp.ne.s32.totalorder %s159, %s161
      %p168 = scmp.eq.s32.totalorder %s25, 1
      %p169 = por %p167, %p168
      %p170 = scmp.ne.s32.totalorder %s161, %s162
      %p171 = scmp.eq.s32.totalorder %s25, 0
      %p172 = por %p170, %p171
      %p173 = scmp.ne.s32.totalorder %s161, %s162
      %p174 = scmp.eq.s32.totalorder %s26, 1
      %p175 = por %p173, %p174
      %p177 = scmp.ne.s32.totalorder %s162, %s176
      %p178 = scmp.eq.s32.totalorder %s26, 0
      %p179 = por %p177, %p178
      %s180 = ssub.s32 %s20, %s27
      %p181 = scmp.eq.s32.totalorder %s180, 0
      %s183 = sadd.s32 %s182, 1
      %s184 = scalar_select %p181, %s182, %s183
      %p187 = pneg %p181
      %p188 = scmp.eq.s32.totalorder %s20, 1
      %p189 = por %p187, %p188
      %p190 = scmp.ne.s32.totalorder %s182, %s185
      %p191 = scmp.eq.s32.totalorder %s20, 0
      %p192 = por %p190, %p191
      %p193 = scmp.ne.s32.totalorder %s182, %s185
      %p194 = scmp.eq.s32.totalorder %s25, 1
      %p195 = por %p193, %p194
      %p196 = scmp.ne.s32.totalorder %s185, %s186
      %p197 = scmp.eq.s32.totalorder %s25, 0
      %p198 = por %p196, %p197
      %p199 = scmp.ne.s32.totalorder %s185, %s186
      %p200 = scmp.eq.s32.totalorder %s26, 1
      %p201 = por %p199, %p200
      %p203 = scmp.ne.s32.totalorder %s186, %s202
      %p204 = scmp.eq.s32.totalorder %s26, 0
      %p205 = por %p203, %p204
      %p206 = scmp.le.s32.totalorder 1, %s20
      %p207 = scmp.lt.s32.totalorder %s20, 3
      %p208 = pnand %p206, %p207
      %p209 = pneg %p208
      // Predicated region
      $region9: #{tpu_custom_call.1} parent=5 // pred_check
        _
      $region10: #{tpu_custom_call.1} parent=5 // pred_check_branch
        %211 = sbr.rel (%p208) target = $region12
      $region11: #{tpu_custom_call.1} parent=5 // pred_region
        %s212 = ssub.s32 %s20, 1
        // Predicated region
        $region13: #{tpu_custom_call.1} parent=11 // pred_check
          %p213 = pneg %p67
        $region14: #{tpu_custom_call.1} parent=11 // pred_check_branch
          %215 = sbr.rel (%p213) target = $region16
        $region15: #{tpu_custom_call.1} parent=11 // pred_region
          %s217 = ssub.s32 3072, 3072
          %218 = vsyncadd [#allocation6], %s217
          %s219 = sshll.u32 [#allocation5], 4
          %s220 = int_to_ptr.vmem [resolvable:$true] %s219
          %225 = dma.hbm_to_vmem [thread:$0]  %s1, 3072, %s220, [#allocation6], 64, 64, 4
        $region16: #{tpu_custom_call.1} parent=11 // pred_fallthru
          _
        // Predicated region
        $region17: #{tpu_custom_call.1} parent=11 // pred_check
          %p226 = pneg %p88
        $region18: #{tpu_custom_call.1} parent=11 // pred_check_branch
          %228 = sbr.rel (%p226) target = $region20
        $region19: #{tpu_custom_call.1} parent=11 // pred_region
          _
        $region20: #{tpu_custom_call.1} parent=11 // pred_fallthru
          _
        // Predicated region
        $region21: #{tpu_custom_call.1} parent=11 // pred_check
          %p229 = pneg %p109
        $region22: #{tpu_custom_call.1} parent=11 // pred_check_branch
          %231 = sbr.rel (%p229) target = $region24
        $region23: #{tpu_custom_call.1} parent=11 // pred_region
          _
        $region24: #{tpu_custom_call.1} parent=11 // pred_fallthru
          _
        // Predicated region
        $region25: #{tpu_custom_call.1} parent=11 // pred_check
          %p232 = pneg %p130
        $region26: #{tpu_custom_call.1} parent=11 // pred_check_branch
          %234 = sbr.rel (%p232) target = $region28
        $region27: #{tpu_custom_call.1} parent=11 // pred_region
          %s236 = ssub.s32 3072, 3072
          %237 = vsyncadd [#allocation6], %s236
          %s238 = sshll.u32 [#allocation7], 4
          %s239 = int_to_ptr.vmem [resolvable:$true] %s238
          %244 = dma.hbm_to_vmem [thread:$0]  %s4, 3072, %s239, [#allocation6], 64, 64, 4
        $region28: #{tpu_custom_call.1} parent=11 // pred_fallthru
          _
        // Predicated region
        $region29: #{tpu_custom_call.1} parent=11 // pred_check
          %p245 = pneg %p151
        $region30: #{tpu_custom_call.1} parent=11 // pred_check_branch
          %247 = sbr.rel (%p245) target = $region32
        $region31: #{tpu_custom_call.1} parent=11 // pred_region
          _
        $region32: #{tpu_custom_call.1} parent=11 // pred_fallthru
          _
        // Predicated region
        $region33: #{tpu_custom_call.1} parent=11 // pred_check
          %p248 = pneg %p172
        $region34: #{tpu_custom_call.1} parent=11 // pred_check_branch
          %250 = sbr.rel (%p248) target = $region36
        $region35: #{tpu_custom_call.1} parent=11 // pred_region
          _
        $region36: #{tpu_custom_call.1} parent=11 // pred_fallthru
          _
      $region12: #{tpu_custom_call.1} parent=5 // pred_fallthru
        _
      %p251 = scmp.lt.s32.totalorder %s20, 2
      // Predicated region
      $region37: #{tpu_custom_call.1} parent=5 // pred_check
        %p252 = pneg %p251
      $region38: #{tpu_custom_call.1} parent=5 // pred_check_branch
        %254 = sbr.rel (%p252) target = $region40
      $region39: #{tpu_custom_call.1} parent=5 // pred_region
        // Predicated region
        $region41: #{tpu_custom_call.1} parent=39 // pred_check
          %p255 = pneg %p40
        $region42: #{tpu_custom_call.1} parent=39 // pred_check_branch
          %257 = sbr.rel (%p255) target = $region44
        $region43: #{tpu_custom_call.1} parent=39 // pred_region
          %s258 = sand.u32 %s30, 1
          %s259 = scalar_lea.sflag [#allocation3], %s258
          %s260 = sand.u32 %s30, 1
          %s261 = smul.addr %s260, 16
          %s262 = scalar_lea.vmem [#allocation2], %s261
          %s264 = ssub.s32 256, 256
          %265 = vsyncadd %s259, %s264
          %s266 = smul.addr %s20, 2
          %s267 = smul.addr %s266, 128
          %s268 = scalar_lea.hbm %s0, %s267
          %s269 = sshll.u32 %s262, 4
          %s270 = int_to_ptr.vmem [resolvable:$true] %s269
          %275 = dma.hbm_to_vmem [thread:$0]  %s268, 256, %s270, %s259, 128, 128, 8
        $region44: #{tpu_custom_call.1} parent=39 // pred_fallthru
          _
      $region40: #{tpu_custom_call.1} parent=5 // pred_fallthru
        _
      %p276 = scmp.le.s32.totalorder 1, %s20
      %p277 = scmp.lt.s32.totalorder %s20, 3
      %p278 = pnand %p276, %p277
      %p279 = pneg %p278
      // Predicated region
      $region45: #{tpu_custom_call.1} parent=5 // pred_check
        _
      $region46: #{tpu_custom_call.1} parent=5 // pred_check_branch
        %281 = sbr.rel (%p278) target = $region48
      $region47: #{tpu_custom_call.1} parent=5 // pred_region
        %s282 = ssub.s32 %s20, 1
        %s283 = sand.u32 %s33, 1
        %s284 = scalar_lea.sflag [#allocation3], %s283
        %s285 = sand.u32 %s33, 1
        %s286 = smul.addr %s285, 16
        %s287 = scalar_lea.vmem [#allocation2], %s286
        // Predicated region
        $region49: #{tpu_custom_call.1} parent=47 // pred_check
          %p288 = pneg %p46
        $region50: #{tpu_custom_call.1} parent=47 // pred_check_branch
          %290 = sbr.rel (%p288) target = $region52
        $region51: #{tpu_custom_call.1} parent=47 // pred_region
          %291 = dma.done %s284, 256
        $region52: #{tpu_custom_call.1} parent=47 // pred_fallthru
          _
        // Predicated region
        $region53: #{tpu_custom_call.1} parent=47 // pred_check
          %p292 = pneg %p67
        $region54: #{tpu_custom_call.1} parent=47 // pred_check_branch
          %294 = sbr.rel (%p292) target = $region56
        $region55: #{tpu_custom_call.1} parent=47 // pred_region
          %295 = dma.done [#allocation6], 3072
        $region56: #{tpu_custom_call.1} parent=47 // pred_fallthru
          _
        // Predicated region
        $region57: #{tpu_custom_call.1} parent=47 // pred_check
          %p296 = pneg %p130
        $region58: #{tpu_custom_call.1} parent=47 // pred_check_branch
          %298 = sbr.rel (%p296) target = $region60
        $region59: #{tpu_custom_call.1} parent=47 // pred_region
          %299 = dma.done [#allocation6], 3072
        $region60: #{tpu_custom_call.1} parent=47 // pred_fallthru
          _
        %s300 = sand.u32 %s33, 1
        %s301 = scalar_lea.sflag [#allocation3], %s300
        %s302 = sand.u32 %s33, 1
        %s303 = smul.addr %s302, 16
        %s304 = scalar_lea.vmem [#allocation2], %s303
        %p305 = pneg %p46
        %p306 = pneg %p43
        %p307 = pneg %p67
        %p308 = pneg %p64
        %p309 = pneg %p88
        %p310 = pneg %p85
        %p311 = pneg %p109
        %p312 = pneg %p106
        %p313 = pneg %p130
        %p314 = pneg %p127
        %p315 = pneg %p151
        %p316 = pneg %p148
        %p317 = pneg %p172
        %p318 = pneg %p169
        %p319 = pneg %p198
        %p320 = pneg %p195
        %s321 = sand.u32 %s185, 1
        %s322 = scalar_lea.sflag [#allocation4], %s321
        %s323 = sand.u32 %s185, 1
        %s324 = smul.addr %s323, 16
        %s325 = scalar_lea.vmem [#allocation8], %s324
        %v327 = vld [vmem:[%s287] sm:$0xff]
        %v328 = vld [vmem:[%s287 + $0x8] sm:$0xff]
        %vm331 = vcmask 1040384
        %v332 = vrot.slane %v327, 7
        %v333 = vrot.slane %v328, 7
        %v334 = vsel %vm331, %v332, %v333
        %v337 = vsel %vm331, 0.0, %v332
        %vm338 = vcmask 1046528
        %v339 = vrot.slane %v327, 1
        %v340 = vrot.slane %v328, 1
        %v341 = vsel %vm338, %v339, %v340
        %v344 = vsel %vm338, %v340, 0.0
        %v345 = vpack.c.bf16 %v334, %v337
        %v346 = vpack.c.bf16 %v328, %v327
        %v347 = vpack.c.bf16 %v344, %v341
        %v348 = vld [vmem:[#allocation5] sm:$0xf]
        %v349 = vld [vmem:[#allocation5 + $0x4] sm:$0xf]
        %v350 = vld [vmem:[#allocation5 + $0x8] sm:$0xf]
        %v351 = vld [vmem:[#allocation5 + $0xc] sm:$0xf]
        %v352 = vld [vmem:[#allocation5 + $0x10] sm:$0xf]
        %v353 = vld [vmem:[#allocation5 + $0x14] sm:$0xf]
        %v354 = vld [vmem:[#allocation5 + $0x18] sm:$0xf]
        %v355 = vld [vmem:[#allocation5 + $0x1c] sm:$0xf]
        %v356 = vld [vmem:[#allocation5 + $0x20] sm:$0xf]
        %v357 = vld [vmem:[#allocation5 + $0x24] sm:$0xf]
        %v358 = vld [vmem:[#allocation5 + $0x28] sm:$0xf]
        %v359 = vld [vmem:[#allocation5 + $0x2c] sm:$0xf]
        %v360 = vld [vmem:[#allocation5 + $0x30] sm:$0xf]
        %v361 = vld [vmem:[#allocation5 + $0x34] sm:$0xf]
        %v362 = vld [vmem:[#allocation5 + $0x38] sm:$0xf]
        %v363 = vld [vmem:[#allocation5 + $0x3c] sm:$0xf]
        %v364 = vld [vmem:[#allocation5 + $0x40] sm:$0xf]
        %v365 = vld [vmem:[#allocation5 + $0x44] sm:$0xf]
        %v366 = vld [vmem:[#allocation5 + $0x48] sm:$0xf]
        %v367 = vld [vmem:[#allocation5 + $0x4c] sm:$0xf]
        %v368 = vld [vmem:[#allocation5 + $0x50] sm:$0xf]
        %v369 = vld [vmem:[#allocation5 + $0x54] sm:$0xf]
        %v370 = vld [vmem:[#allocation5 + $0x58] sm:$0xf]
        %v371 = vld [vmem:[#allocation5 + $0x5c] sm:$0xf]
        %v372 = vld [vmem:[#allocation5 + $0x60] sm:$0xf]
        %v373 = vld [vmem:[#allocation5 + $0x64] sm:$0xf]
        %v374 = vld [vmem:[#allocation5 + $0x68] sm:$0xf]
        %v375 = vld [vmem:[#allocation5 + $0x6c] sm:$0xf]
        %v376 = vld [vmem:[#allocation5 + $0x70] sm:$0xf]
        %v377 = vld [vmem:[#allocation5 + $0x74] sm:$0xf]
        %v378 = vld [vmem:[#allocation5 + $0x78] sm:$0xf]
        %v379 = vld [vmem:[#allocation5 + $0x7c] sm:$0xf]
        %v380 = vld [vmem:[#allocation5 + $0x80] sm:$0xf]
        %v381 = vld [vmem:[#allocation5 + $0x84] sm:$0xf]
        %v382 = vld [vmem:[#allocation5 + $0x88] sm:$0xf]
        %v383 = vld [vmem:[#allocation5 + $0x8c] sm:$0xf]
        %v384 = vld [vmem:[#allocation5 + $0x90] sm:$0xf]
        %v385 = vld [vmem:[#allocation5 + $0x94] sm:$0xf]
        %v386 = vld [vmem:[#allocation5 + $0x98] sm:$0xf]
        %v387 = vld [vmem:[#allocation5 + $0x9c] sm:$0xf]
        %v388 = vld [vmem:[#allocation5 + $0xa0] sm:$0xf]
        %v389 = vld [vmem:[#allocation5 + $0xa4] sm:$0xf]
        %v390 = vld [vmem:[#allocation5 + $0xa8] sm:$0xf]
        %v391 = vld [vmem:[#allocation5 + $0xac] sm:$0xf]
        %v392 = vld [vmem:[#allocation5 + $0xb0] sm:$0xf]
        %v393 = vld [vmem:[#allocation5 + $0xb4] sm:$0xf]
        %v394 = vld [vmem:[#allocation5 + $0xb8] sm:$0xf]
        %v395 = vld [vmem:[#allocation5 + $0xbc] sm:$0xf]
        %v444 = vunpack.c.l.b16 %v348
        %v445 = vunpack.c.l.b16 %v349
        %v446 = vunpack.c.l.b16 %v350
        %v447 = vunpack.c.l.b16 %v351
        %v448 = vunpack.c.l.b16 %v352
        %v449 = vunpack.c.l.b16 %v353
        %v450 = vunpack.c.l.b16 %v354
        %v451 = vunpack.c.l.b16 %v355
        %v452 = vunpack.c.l.b16 %v356
        %v453 = vunpack.c.l.b16 %v357
        %v454 = vunpack.c.l.b16 %v358
        %v455 = vunpack.c.l.b16 %v359
        %v456 = vunpack.c.l.b16 %v360
        %v457 = vunpack.c.l.b16 %v361
        %v458 = vunpack.c.l.b16 %v362
        %v459 = vunpack.c.l.b16 %v363
        %v460 = vunpack.c.l.b16 %v364
        %v461 = vunpack.c.l.b16 %v365
        %v462 = vunpack.c.l.b16 %v366
        %v463 = vunpack.c.l.b16 %v367
        %v464 = vunpack.c.l.b16 %v368
        %v465 = vunpack.c.l.b16 %v369
        %v466 = vunpack.c.l.b16 %v370
        %v467 = vunpack.c.l.b16 %v371
        %v468 = vunpack.c.l.b16 %v372
        %v469 = vunpack.c.l.b16 %v373
        %v470 = vunpack.c.l.b16 %v374
        %v471 = vunpack.c.l.b16 %v375
        %v472 = vunpack.c.l.b16 %v376
        %v473 = vunpack.c.l.b16 %v377
        %v474 = vunpack.c.l.b16 %v378
        %v475 = vunpack.c.l.b16 %v379
        %v476 = vunpack.c.l.b16 %v380
        %v477 = vunpack.c.l.b16 %v381
        %v478 = vunpack.c.l.b16 %v382
        %v479 = vunpack.c.l.b16 %v383
        %v480 = vunpack.c.l.b16 %v384
        %v481 = vunpack.c.l.b16 %v385
        %v482 = vunpack.c.l.b16 %v386
        %v483 = vunpack.c.l.b16 %v387
        %v484 = vunpack.c.l.b16 %v388
        %v485 = vunpack.c.l.b16 %v389
        %v486 = vunpack.c.l.b16 %v390
        %v487 = vunpack.c.l.b16 %v391
        %v488 = vunpack.c.l.b16 %v392
        %v489 = vunpack.c.l.b16 %v393
        %v490 = vunpack.c.l.b16 %v394
        %v491 = vunpack.c.l.b16 %v395
        %v492 = vpack.c.b16 %v445, %v444
        %v493 = vpack.c.b16 %v447, %v446
        %v494 = vpack.c.b16 %v449, %v448
        %v495 = vpack.c.b16 %v451, %v450
        %v496 = vpack.c.b16 %v453, %v452
        %v497 = vpack.c.b16 %v455, %v454
        %v498 = vpack.c.b16 %v457, %v456
        %v499 = vpack.c.b16 %v459, %v458
        %v500 = vpack.c.b16 %v461, %v460
        %v501 = vpack.c.b16 %v463, %v462
        %v502 = vpack.c.b16 %v465, %v464
        %v503 = vpack.c.b16 %v467, %v466
        %v504 = vpack.c.b16 %v469, %v468
        %v505 = vpack.c.b16 %v471, %v470
        %v506 = vpack.c.b16 %v473, %v472
        %v507 = vpack.c.b16 %v475, %v474
        %v508 = vpack.c.b16 %v477, %v476
        %v509 = vpack.c.b16 %v479, %v478
        %v510 = vpack.c.b16 %v481, %v480
        %v511 = vpack.c.b16 %v483, %v482
        %v512 = vpack.c.b16 %v485, %v484
        %v513 = vpack.c.b16 %v487, %v486
        %v514 = vpack.c.b16 %v489, %v488
        %v515 = vpack.c.b16 %v491, %v490
        %540 = vmatprep.subr.bf16.mxu0 0
        %541 = vmatpush1.bf16.msra.mxu0 %v499
        %542 = vmatprep.subr.bf16.mxu0 0
        %543 = vmatpush1.bf16.msra.mxu0 %v498
        %544 = vmatprep.subr.bf16.mxu0 0
        %545 = vmatpush1.bf16.msra.mxu0 %v497
        %546 = vmatprep.subr.bf16.mxu0 0
        %547 = vmatpush1.bf16.msra.mxu0 %v496
        %548 = vmatprep.subr.bf16.mxu0 0
        %549 = vmatpush1.bf16.msra.mxu0 %v495
        %550 = vmatprep.subr.bf16.mxu0 0
        %551 = vmatpush1.bf16.msra.mxu0 %v494
        %552 = vmatprep.subr.bf16.mxu0 0
        %553 = vmatpush1.bf16.msra.mxu0 %v493
        %554 = vmatprep.subr.bf16.mxu0 0
        %555 = vmatpush1.bf16.msra.mxu0 %v492
        %556 = vmatprep.subr.bf16.mxu0 0
        %557 = vmatpush2.bf16.msra.mxu0 %v507
        %558 = vmatprep.subr.bf16.mxu0 0
        %559 = vmatpush2.bf16.msra.mxu0 %v506
        %560 = vmatprep.subr.bf16.mxu0 0
        %561 = vmatpush2.bf16.msra.mxu0 %v505
        %562 = vmatprep.subr.bf16.mxu0 0
        %563 = vmatpush2.bf16.msra.mxu0 %v504
        %564 = vmatprep.subr.bf16.mxu0 0
        %565 = vmatpush2.bf16.msra.mxu0 %v503
        %566 = vmatprep.subr.bf16.mxu0 0
        %567 = vmatpush2.bf16.msra.mxu0 %v502
        %568 = vmatprep.subr.bf16.mxu0 0
        %569 = vmatpush2.bf16.msra.mxu0 %v501
        %570 = vmatprep.subr.bf16.mxu0 0
        %571 = vmatpush2.bf16.msra.mxu0 %v500
        %572 = vmatprep.mubr.bf16.mxu0 %v346
        %573 = vmatmul.mubr.bf16.gmra.mxu0 %v345
        %v574 = vpop.f32.mrf.mxu0
        %v575 = vadd.f32 0.0, %v574
        %v576 = vpop.f32.mrf.mxu0
        %v577 = vpop.f32.mrf.mxu0
        %v578 = vadd.f32 0.0, %v577
        %v579 = vpop.f32.mrf.mxu0
        %580 = vdwg.mxu0
        %581 = vmatprep.subr.bf16.mxu0 0
        %582 = vmatpush1.bf16.msra.mxu0 %v515
        %583 = vmatprep.subr.bf16.mxu0 0
        %584 = vmatpush1.bf16.msra.mxu0 %v514
        %585 = vmatprep.subr.bf16.mxu0 0
        %586 = vmatpush1.bf16.msra.mxu0 %v513
        %587 = vmatprep.subr.bf16.mxu0 0
        %588 = vmatpush1.bf16.msra.mxu0 %v512
        %589 = vmatprep.subr.bf16.mxu0 0
        %590 = vmatpush1.bf16.msra.mxu0 %v511
        %591 = vmatprep.subr.bf16.mxu0 0
        %592 = vmatpush1.bf16.msra.mxu0 %v510
        %593 = vmatprep.subr.bf16.mxu0 0
        %594 = vmatpush1.bf16.msra.mxu0 %v509
        %595 = vmatprep.subr.bf16.mxu0 0
        %596 = vmatpush1.bf16.msra.mxu0 %v508
        %597 = vmatprep.subr.bf16.mxu0 0
        %598 = vmatpush2.bf16.msra.mxu0 0
        %599 = vmatprep.subr.bf16.mxu0 0
        %600 = vmatpush2.bf16.msra.mxu0 0
        %601 = vmatprep.subr.bf16.mxu0 0
        %602 = vmatpush2.bf16.msra.mxu0 0
        %603 = vmatprep.subr.bf16.mxu0 0
        %604 = vmatpush2.bf16.msra.mxu0 0
        %605 = vmatprep.subr.bf16.mxu0 0
        %606 = vmatpush2.bf16.msra.mxu0 0
        %607 = vmatprep.subr.bf16.mxu0 0
        %608 = vmatpush2.bf16.msra.mxu0 0
        %609 = vmatprep.subr.bf16.mxu0 0
        %610 = vmatpush2.bf16.msra.mxu0 0
        %611 = vmatprep.subr.bf16.mxu0 0
        %612 = vmatpush2.bf16.msra.mxu0 0
        %613 = vmatprep.mubr.bf16.mxu0 0
        %614 = vmatmul.mubr.bf16.gmra.mxu0 %v347
        %v615 = vpop.f32.mrf.mxu0
        %v616 = vadd.f32 %v575, %v615
        %v617 = vpop.f32.mrf.mxu0
        %v618 = vpop.f32.mrf.mxu0
        %v619 = vadd.f32 %v578, %v618
        %v620 = vpop.f32.mrf.mxu0
        %621 = vdwg.mxu0
        %v622 = vld [vmem:[%s2] sm:$0x1]
        %v624 = vlaneseq
        %v625 = vshrl.u32 %v624, 7
        %v626 = vsub.s32 0, %v625
        %v627 = vrot.slane %v622, %v626
        %v629 = vmul.f32 %v616, %v627
        %v630 = vmul.f32 %v619, %v627
        %v631 = vld [vmem:[%s3] sm:$0x1]
        %v633 = vlaneseq
        %v634 = vshrl.u32 %v633, 7
        %v635 = vsub.s32 0, %v634
        %v636 = vrot.slane %v631, %v635
        %v638 = vadd.f32 %v629, %v636
        %v639 = vadd.f32 %v630, %v636
        %v640 = vmax.f32 %v638, 0.0
        %v641 = vmax.f32 %v639, 0.0
        %v644 = vrot.slane %v640, 7
        %v645 = vrot.slane %v641, 7
        %v646 = vsel %vm331, %v644, %v645
        %v649 = vsel %vm331, 0.0, %v644
        %v650 = vrot.slane %v640, 1
        %v651 = vrot.slane %v641, 1
        %v652 = vsel %vm338, %v650, %v651
        %v655 = vsel %vm338, %v651, 0.0
        %v656 = vpack.c.bf16 %v646, %v649
        %v657 = vpack.c.bf16 %v641, %v640
        %v658 = vpack.c.bf16 %v655, %v652
        %v659 = vld [vmem:[#allocation7] sm:$0xf]
        %v660 = vld [vmem:[#allocation7 + $0x4] sm:$0xf]
        %v661 = vld [vmem:[#allocation7 + $0x8] sm:$0xf]
        %v662 = vld [vmem:[#allocation7 + $0xc] sm:$0xf]
        %v663 = vld [vmem:[#allocation7 + $0x10] sm:$0xf]
        %v664 = vld [vmem:[#allocation7 + $0x14] sm:$0xf]
        %v665 = vld [vmem:[#allocation7 + $0x18] sm:$0xf]
        %v666 = vld [vmem:[#allocation7 + $0x1c] sm:$0xf]
        %v667 = vld [vmem:[#allocation7 + $0x20] sm:$0xf]
        %v668 = vld [vmem:[#allocation7 + $0x24] sm:$0xf]
        %v669 = vld [vmem:[#allocation7 + $0x28] sm:$0xf]
        %v670 = vld [vmem:[#allocation7 + $0x2c] sm:$0xf]
        %v671 = vld [vmem:[#allocation7 + $0x30] sm:$0xf]
        %v672 = vld [vmem:[#allocation7 + $0x34] sm:$0xf]
        %v673 = vld [vmem:[#allocation7 + $0x38] sm:$0xf]
        %v674 = vld [vmem:[#allocation7 + $0x3c] sm:$0xf]
        %v675 = vld [vmem:[#allocation7 + $0x40] sm:$0xf]
        %v676 = vld [vmem:[#allocation7 + $0x44] sm:$0xf]
        %v677 = vld [vmem:[#allocation7 + $0x48] sm:$0xf]
        %v678 = vld [vmem:[#allocation7 + $0x4c] sm:$0xf]
        %v679 = vld [vmem:[#allocation7 + $0x50] sm:$0xf]
        %v680 = vld [vmem:[#allocation7 + $0x54] sm:$0xf]
        %v681 = vld [vmem:[#allocation7 + $0x58] sm:$0xf]
        %v682 = vld [vmem:[#allocation7 + $0x5c] sm:$0xf]
        %v683 = vld [vmem:[#allocation7 + $0x60] sm:$0xf]
        %v684 = vld [vmem:[#allocation7 + $0x64] sm:$0xf]
        %v685 = vld [vmem:[#allocation7 + $0x68] sm:$0xf]
        %v686 = vld [vmem:[#allocation7 + $0x6c] sm:$0xf]
        %v687 = vld [vmem:[#allocation7 + $0x70] sm:$0xf]
        %v688 = vld [vmem:[#allocation7 + $0x74] sm:$0xf]
        %v689 = vld [vmem:[#allocation7 + $0x78] sm:$0xf]
        %v690 = vld [vmem:[#allocation7 + $0x7c] sm:$0xf]
        %v691 = vld [vmem:[#allocation7 + $0x80] sm:$0xf]
        %v692 = vld [vmem:[#allocation7 + $0x84] sm:$0xf]
        %v693 = vld [vmem:[#allocation7 + $0x88] sm:$0xf]
        %v694 = vld [vmem:[#allocation7 + $0x8c] sm:$0xf]
        %v695 = vld [vmem:[#allocation7 + $0x90] sm:$0xf]
        %v696 = vld [vmem:[#allocation7 + $0x94] sm:$0xf]
        %v697 = vld [vmem:[#allocation7 + $0x98] sm:$0xf]
        %v698 = vld [vmem:[#allocation7 + $0x9c] sm:$0xf]
        %v699 = vld [vmem:[#allocation7 + $0xa0] sm:$0xf]
        %v700 = vld [vmem:[#allocation7 + $0xa4] sm:$0xf]
        %v701 = vld [vmem:[#allocation7 + $0xa8] sm:$0xf]
        %v702 = vld [vmem:[#allocation7 + $0xac] sm:$0xf]
        %v703 = vld [vmem:[#allocation7 + $0xb0] sm:$0xf]
        %v704 = vld [vmem:[#allocation7 + $0xb4] sm:$0xf]
        %v705 = vld [vmem:[#allocation7 + $0xb8] sm:$0xf]
        %v706 = vld [vmem:[#allocation7 + $0xbc] sm:$0xf]
        %v755 = vunpack.c.l.b16 %v659
        %v756 = vunpack.c.l.b16 %v660
        %v757 = vunpack.c.l.b16 %v661
        %v758 = vunpack.c.l.b16 %v662
        %v759 = vunpack.c.l.b16 %v663
        %v760 = vunpack.c.l.b16 %v664
        %v761 = vunpack.c.l.b16 %v665
        %v762 = vunpack.c.l.b16 %v666
        %v763 = vunpack.c.l.b16 %v667
        %v764 = vunpack.c.l.b16 %v668
        %v765 = vunpack.c.l.b16 %v669
        %v766 = vunpack.c.l.b16 %v670
        %v767 = vunpack.c.l.b16 %v671
        %v768 = vunpack.c.l.b16 %v672
        %v769 = vunpack.c.l.b16 %v673
        %v770 = vunpack.c.l.b16 %v674
        %v771 = vunpack.c.l.b16 %v675
        %v772 = vunpack.c.l.b16 %v676
        %v773 = vunpack.c.l.b16 %v677
        %v774 = vunpack.c.l.b16 %v678
        %v775 = vunpack.c.l.b16 %v679
        %v776 = vunpack.c.l.b16 %v680
        %v777 = vunpack.c.l.b16 %v681
        %v778 = vunpack.c.l.b16 %v682
        %v779 = vunpack.c.l.b16 %v683
        %v780 = vunpack.c.l.b16 %v684
        %v781 = vunpack.c.l.b16 %v685
        %v782 = vunpack.c.l.b16 %v686
        %v783 = vunpack.c.l.b16 %v687
        %v784 = vunpack.c.l.b16 %v688
        %v785 = vunpack.c.l.b16 %v689
        %v786 = vunpack.c.l.b16 %v690
        %v787 = vunpack.c.l.b16 %v691
        %v788 = vunpack.c.l.b16 %v692
        %v789 = vunpack.c.l.b16 %v693
        %v790 = vunpack.c.l.b16 %v694
        %v791 = vunpack.c.l.b16 %v695
        %v792 = vunpack.c.l.b16 %v696
        %v793 = vunpack.c.l.b16 %v697
        %v794 = vunpack.c.l.b16 %v698
        %v795 = vunpack.c.l.b16 %v699
        %v796 = vunpack.c.l.b16 %v700
        %v797 = vunpack.c.l.b16 %v701
        %v798 = vunpack.c.l.b16 %v702
        %v799 = vunpack.c.l.b16 %v703
        %v800 = vunpack.c.l.b16 %v704
        %v801 = vunpack.c.l.b16 %v705
        %v802 = vunpack.c.l.b16 %v706
        %v803 = vpack.c.b16 %v756, %v755
        %v804 = vpack.c.b16 %v758, %v757
        %v805 = vpack.c.b16 %v760, %v759
        %v806 = vpack.c.b16 %v762, %v761
        %v807 = vpack.c.b16 %v764, %v763
        %v808 = vpack.c.b16 %v766, %v765
        %v809 = vpack.c.b16 %v768, %v767
        %v810 = vpack.c.b16 %v770, %v769
        %v811 = vpack.c.b16 %v772, %v771
        %v812 = vpack.c.b16 %v774, %v773
        %v813 = vpack.c.b16 %v776, %v775
        %v814 = vpack.c.b16 %v778, %v777
        %v815 = vpack.c.b16 %v780, %v779
        %v816 = vpack.c.b16 %v782, %v781
        %v817 = vpack.c.b16 %v784, %v783
        %v818 = vpack.c.b16 %v786, %v785
        %v819 = vpack.c.b16 %v788, %v787
        %v820 = vpack.c.b16 %v790, %v789
        %v821 = vpack.c.b16 %v792, %v791
        %v822 = vpack.c.b16 %v794, %v793
        %v823 = vpack.c.b16 %v796, %v795
        %v824 = vpack.c.b16 %v798, %v797
        %v825 = vpack.c.b16 %v800, %v799
        %v826 = vpack.c.b16 %v802, %v801
        %851 = vmatprep.subr.bf16.mxu0 0
        %852 = vmatpush1.bf16.msra.mxu0 %v810
        %853 = vmatprep.subr.bf16.mxu0 0
        %854 = vmatpush1.bf16.msra.mxu0 %v809
        %855 = vmatprep.subr.bf16.mxu0 0
        %856 = vmatpush1.bf16.msra.mxu0 %v808
        %857 = vmatprep.subr.bf16.mxu0 0
        %858 = vmatpush1.bf16.msra.mxu0 %v807
        %859 = vmatprep.subr.bf16.mxu0 0
        %860 = vmatpush1.bf16.msra.mxu0 %v806
        %861 = vmatprep.subr.bf16.mxu0 0
        %862 = vmatpush1.bf16.msra.mxu0 %v805
        %863 = vmatprep.subr.bf16.mxu0 0
        %864 = vmatpush1.bf16.msra.mxu0 %v804
        %865 = vmatprep.subr.bf16.mxu0 0
        %866 = vmatpush1.bf16.msra.mxu0 %v803
        %867 = vmatprep.subr.bf16.mxu0 0
        %868 = vmatpush2.bf16.msra.mxu0 %v818
        %869 = vmatprep.subr.bf16.mxu0 0
        %870 = vmatpush2.bf16.msra.mxu0 %v817
        %871 = vmatprep.subr.bf16.mxu0 0
        %872 = vmatpush2.bf16.msra.mxu0 %v816
        %873 = vmatprep.subr.bf16.mxu0 0
        %874 = vmatpush2.bf16.msra.mxu0 %v815
        %875 = vmatprep.subr.bf16.mxu0 0
        %876 = vmatpush2.bf16.msra.mxu0 %v814
        %877 = vmatprep.subr.bf16.mxu0 0
        %878 = vmatpush2.bf16.msra.mxu0 %v813
        %879 = vmatprep.subr.bf16.mxu0 0
        %880 = vmatpush2.bf16.msra.mxu0 %v812
        %881 = vmatprep.subr.bf16.mxu0 0
        %882 = vmatpush2.bf16.msra.mxu0 %v811
        %883 = vmatprep.mubr.bf16.mxu0 %v657
        %884 = vmatmul.mubr.bf16.gmra.mxu0 %v656
        %v885 = vpop.f32.mrf.mxu0
        %v886 = vadd.f32 0.0, %v885
        %v887 = vpop.f32.mrf.mxu0
        %v888 = vpop.f32.mrf.mxu0
        %v889 = vadd.f32 0.0, %v888
        %v890 = vpop.f32.mrf.mxu0
        %891 = vdwg.mxu0
        %892 = vmatprep.subr.bf16.mxu0 0
        %893 = vmatpush1.bf16.msra.mxu0 %v826
        %894 = vmatprep.subr.bf16.mxu0 0
        %895 = vmatpush1.bf16.msra.mxu0 %v825
        %896 = vmatprep.subr.bf16.mxu0 0
        %897 = vmatpush1.bf16.msra.mxu0 %v824
        %898 = vmatprep.subr.bf16.mxu0 0
        %899 = vmatpush1.bf16.msra.mxu0 %v823
        %900 = vmatprep.subr.bf16.mxu0 0
        %901 = vmatpush1.bf16.msra.mxu0 %v822
        %902 = vmatprep.subr.bf16.mxu0 0
        %903 = vmatpush1.bf16.msra.mxu0 %v821
        %904 = vmatprep.subr.bf16.mxu0 0
        %905 = vmatpush1.bf16.msra.mxu0 %v820
        %906 = vmatprep.subr.bf16.mxu0 0
        %907 = vmatpush1.bf16.msra.mxu0 %v819
        %908 = vmatprep.subr.bf16.mxu0 0
        %909 = vmatpush2.bf16.msra.mxu0 0
        %910 = vmatprep.subr.bf16.mxu0 0
        %911 = vmatpush2.bf16.msra.mxu0 0
        %912 = vmatprep.subr.bf16.mxu0 0
        %913 = vmatpush2.bf16.msra.mxu0 0
        %914 = vmatprep.subr.bf16.mxu0 0
        %915 = vmatpush2.bf16.msra.mxu0 0
        %916 = vmatprep.subr.bf16.mxu0 0
        %917 = vmatpush2.bf16.msra.mxu0 0
        %918 = vmatprep.subr.bf16.mxu0 0
        %919 = vmatpush2.bf16.msra.mxu0 0
        %920 = vmatprep.subr.bf16.mxu0 0
        %921 = vmatpush2.bf16.msra.mxu0 0
        %922 = vmatprep.subr.bf16.mxu0 0
        %923 = vmatpush2.bf16.msra.mxu0 0
        %924 = vmatprep.mubr.bf16.mxu0 0
        %925 = vmatmul.mubr.bf16.gmra.mxu0 %v658
        %v926 = vpop.f32.mrf.mxu0
        %v927 = vadd.f32 %v886, %v926
        %v928 = vpop.f32.mrf.mxu0
        %v929 = vpop.f32.mrf.mxu0
        %v930 = vadd.f32 %v889, %v929
        %v931 = vpop.f32.mrf.mxu0
        %932 = vdwg.mxu0
        %v933 = vld [vmem:[%s5] sm:$0x1]
        %v935 = vlaneseq
        %v936 = vshrl.u32 %v935, 7
        %v937 = vsub.s32 0, %v936
        %v938 = vrot.slane %v933, %v937
        %v940 = vmul.f32 %v927, %v938
        %v941 = vmul.f32 %v930, %v938
        %v942 = vld [vmem:[%s6] sm:$0x1]
        %v944 = vlaneseq
        %v945 = vshrl.u32 %v944, 7
        %v946 = vsub.s32 0, %v945
        %v947 = vrot.slane %v942, %v946
        %v949 = vadd.f32 %v940, %v947
        %v950 = vadd.f32 %v941, %v947
        %v951 = vadd.f32 %v949, %v327
        %v952 = vadd.f32 %v950, %v328
        %v953 = vmax.f32 %v951, 0.0
        %v954 = vmax.f32 %v952, 0.0
        %955 = vst [vmem:[%s325] sm:$0xff] %v953
        %956 = vst [vmem:[%s325 + $0x8] sm:$0xff] %v954
        %s957 = sand.u32 %s185, 1
        %s958 = scalar_lea.sflag [#allocation4], %s957
        %s959 = sand.u32 %s185, 1
        %s960 = smul.addr %s959, 16
        %s961 = scalar_lea.vmem [#allocation8], %s960
        // Predicated region
        $region61: #{tpu_custom_call.1} parent=47 // pred_check
          %p962 = pneg %p195
        $region62: #{tpu_custom_call.1} parent=47 // pred_check_branch
          %964 = sbr.rel (%p962) target = $region64
        $region63: #{tpu_custom_call.1} parent=47 // pred_region
          %s966 = ssub.s32 256, 256
          %967 = vsyncadd %s958, %s966
          %s968 = smul.addr %s25, 2
          %s969 = smul.addr %s968, 128
          %s970 = scalar_lea.hbm %s7, %s969
          %s971 = sshll.u32 %s961, 4
          %s972 = int_to_ptr.vmem [resolvable:$true] %s971
          %977 = dma.vmem_to_hbm [thread:$0]  %s972, 256, %s970, %s958, 128, 128, 8
        $region64: #{tpu_custom_call.1} parent=47 // pred_fallthru
          _
      $region48: #{tpu_custom_call.1} parent=5 // pred_fallthru
        _
      %p978 = scmp.le.s32.totalorder 2, %s20
      // Predicated region
      $region65: #{tpu_custom_call.1} parent=5 // pred_check
        %p979 = pneg %p978
      $region66: #{tpu_custom_call.1} parent=5 // pred_check_branch
        %981 = sbr.rel (%p979) target = $region68
      $region67: #{tpu_custom_call.1} parent=5 // pred_region
        %s982 = ssub.s32 %s20, 2
        // Predicated region
        $region69: #{tpu_custom_call.1} parent=67 // pred_check
          %p983 = pneg %p201
        $region70: #{tpu_custom_call.1} parent=67 // pred_check_branch
          %985 = sbr.rel (%p983) target = $region72
        $region71: #{tpu_custom_call.1} parent=67 // pred_region
          %s986 = sand.u32 %s186, 1
          %s987 = scalar_lea.sflag [#allocation4], %s986
          %s988 = sand.u32 %s186, 1
          %s989 = smul.addr %s988, 16
          %s990 = scalar_lea.vmem [#allocation8], %s989
          %991 = dma.done %s987, 256
        $region72: #{tpu_custom_call.1} parent=67 // pred_fallthru
          _
      $region68: #{tpu_custom_call.1} parent=5 // pred_fallthru
        _
    $region6: #{tpu_custom_call.1} parent=1 // loop_footer
      %s24 = sadd.s32 1, %s20
    $region7: #{tpu_custom_call.1} parent=1 // loop_footer_branch
      %19 = sbr.rel target = $region3
    $region8: #{tpu_custom_call.1} parent=1 // loop_exit
      _
    %992 = vsyncpa [#allocation3], 1
    %s993 = scalar_lea.sflag [#allocation3], 1
    %994 = vsyncpa %s993, 1
    %995 = vsyncpa [#allocation6], 1
    %996 = vsyncpa [#allocation4], 1
    %s997 = scalar_lea.sflag [#allocation4], 1
    %998 = vsyncpa %s997, 1

</llo_original>
